<compile_context>
chip_gen: v7x
topology: tpu7x:2x2x1
jax: 0.10.0
libtpu: 0.0.40
codegen_flags: <defaults>
</compile_context>

<pallas_src>
import jax
import jax.numpy as jnp
from jax.experimental import pallas as pl
from jax.experimental.pallas import tpu as pltpu


def _round_up(n, m):
    return ((n + m - 1) // m) * m


def _critic_kernel(x_ref, a_ref, w1x_ref, w1a_ref, b1_ref, w2_ref, b2_ref, o_ref):
    # First linear layer on the (virtual) concat [x, a], f32 accumulation:
    #   h = x @ W1[:obs_flat] + a @ W1[obs_flat:] + b1
    h = jnp.dot(x_ref[...], w1x_ref[...], preferred_element_type=jnp.float32)
    h = h + jnp.dot(a_ref[...], w1a_ref[...], preferred_element_type=jnp.float32)
    h = h + b1_ref[...]                       # (TB, 128) + (1, 128) broadcast
    h = jnp.maximum(h, 0.0)                   # ReLU on the VPU
    # Second layer: out_features == 1  ->  VPU multiply + lane reduce (XLU),
    # not an MXU matmul.  b2 is a scalar read from SMEM.
    out = jnp.sum(h * w2_ref[...], axis=-1, keepdims=True) + b2_ref[0]
    o_ref[...] = out.astype(o_ref.dtype)


def critic_forward(x, a, params, *, block_b=512, compute_dtype=jnp.float32):
    """x: (B, d0, d1), a: (B, act_dim) -> (B, 1) float32.

    compute_dtype: dtype used for the streamed activations and W1 (bf16 halves
    HBM traffic; accumulation is always f32).  Biases / W2 / output stay f32.
    """
    B = x.shape[0]
    obs_flat = x.shape[1] * x.shape[2]
    act_dim = a.shape[1]
    hidden = params["w1"].shape[1]

    # Same element order as torch.flatten(start_dim=1).
    x2d = x.reshape(B, obs_flat).astype(compute_dtype)
    a2d = a.astype(compute_dtype)

    w1x = params["w1"][:obs_flat, :].astype(compute_dtype)   # (obs_flat, H)
    w1a = params["w1"][obs_flat:, :].astype(compute_dtype)   # (act_dim, H)
    b1 = params["b1"].reshape(1, hidden).astype(jnp.float32)  # (1, H)
    w2_row = params["w2"].reshape(1, hidden).astype(jnp.float32)  # (1, H)
    b2 = params["b2"].reshape(1).astype(jnp.float32)           # (1,) scalar (SMEM)

    # Batch tile: multiple of 16 (covers bf16 sublane packing; also satisfies
    # the (8,128) divisibility rule for f32), capped so the double-buffered
    # input windows stay a few MiB at most on every generation.
    tb = min(block_b, _round_up(B, 16))
    bp = _round_up(B, tb)
    if bp != B:
        x2d = jnp.pad(x2d, ((0, bp - B), (0, 0)))
        a2d = jnp.pad(a2d, ((0, bp - B), (0, 0)))
    num_blocks = bp // tb

    itemsize = jnp.dtype(compute_dtype).itemsize
    cost = pl.CostEstimate(
        flops=2 * bp * (obs_flat + act_dim + 1) * hidden,
        transcendentals=0,
        bytes_accessed=(
            bp * (obs_flat + act_dim) * itemsize          # streamed activations
            + bp * 4                                      # output
            + (obs_flat + act_dim) * hidden * itemsize    # W1
            + (2 * hidden + 1) * 4                        # b1, w2, b2
        ),
    )

    out = pl.pallas_call(
        _critic_kernel,
        out_shape=jax.ShapeDtypeStruct((bp, 1), jnp.float32),
        grid=(num_blocks,),
        in_specs=[
            pl.BlockSpec((tb, obs_flat), lambda i: (i, 0)),      # x tile (streamed)
            pl.BlockSpec((tb, act_dim), lambda i: (i, 0)),       # a tile (streamed)
            pl.BlockSpec((obs_flat, hidden), lambda i: (0, 0)),  # W1[:obs_flat] resident
            pl.BlockSpec((act_dim, hidden), lambda i: (0, 0)),   # W1[obs_flat:] resident
            pl.BlockSpec((1, hidden), lambda i: (0, 0)),         # b1 resident
            pl.BlockSpec((1, hidden), lambda i: (0, 0)),         # w2 row resident
            pl.BlockSpec(memory_space=pltpu.MemorySpace.SMEM),   # b2 scalar
        ],
        out_specs=pl.BlockSpec((tb, 1), lambda i: (i, 0)),
        compiler_params=pltpu.CompilerParams(
            dimension_semantics=("parallel",),   # megacore sharding on v7x
        ),
        cost_estimate=cost,
    )(x2d, a2d, w1x, w1a, b1, w2_row, b2)

    return out[:B]


def init_params(key, obs_dim, act_dim, hidden=128):
    """Deterministic init mimicking PyTorch's default Linear init."""
    in_dim = obs_dim[0] * obs_dim[1] + act_dim
    k1, k2, k3, k4 = jax.random.split(key, 4)
    bound1 = 1.0 / jnp.sqrt(in_dim)
    bound2 = 1.0 / jnp.sqrt(hidden)
    return {
        "w1": jax.random.uniform(k1, (in_dim, hidden), jnp.float32, -bound1, bound1),
        "b1": jax.random.uniform(k2, (hidden,), jnp.float32, -bound1, bound1),
        "w2": jax.random.uniform(k3, (hidden, 1), jnp.float32, -bound2, bound2),
        "b2": jax.random.uniform(k4, (1,), jnp.float32, -bound2, bound2),
    }


def critic_reference(x, a, params):
    """Pure-JAX reference identical to the PyTorch forward (f32)."""
    B = x.shape[0]
    xa = jnp.concatenate([x.reshape(B, -1), a], axis=1)
    h = jnp.maximum(xa @ params["w1"] + params["b1"], 0.0)
    return h @ params["w2"] + params["b2"]


if __name__ == "__main__":
    key = jax.random.PRNGKey(0)
    kx, ka, kp = jax.random.split(key, 3)

    obs_dim = (4, 16)   # obs_flat = 64
    act_dim = 8
    batch = 2

    x = jax.random.normal(kx, (batch, obs_dim[0], obs_dim[1]), jnp.float32)
    a = jax.random.normal(ka, (batch, act_dim), jnp.float32)
    params = init_params(kp, obs_dim, act_dim)

    ref = critic_reference(x, a, params)

    # f32 path: exact semantics of the PyTorch module.
    out_f32 = jax.block_until_ready(
        critic_forward(x, a, params, compute_dtype=jnp.float32))
    assert out_f32.shape == (batch, 1)
    assert jnp.allclose(out_f32, ref, atol=1e-4, rtol=1e-4), (out_f32, ref)

    # bf16 fast path (halves the dominant HBM stream; f32 accumulation).
    out_bf16 = jax.block_until_ready(
        critic_forward(x, a, params, compute_dtype=jnp.bfloat16))
    assert out_bf16.shape == (batch, 1)
    assert jnp.allclose(out_bf16, ref, atol=3e-2, rtol=3e-2), (out_bf16, ref)

    print("KERNEL_OK")
</pallas_src>

<mosaic_0001>
module attributes {stable_mosaic.version = 11 : i64} {
  func.func @_critic_kernel(%arg0: i32, %arg1: memref<16x64xf32, #tpu.memory_space<vmem>>, %arg2: memref<16x8xf32, #tpu.memory_space<vmem>>, %arg3: memref<64x128xf32, #tpu.memory_space<vmem>>, %arg4: memref<8x128xf32, #tpu.memory_space<vmem>>, %arg5: memref<1x128xf32, #tpu.memory_space<vmem>>, %arg6: memref<1x128xf32, #tpu.memory_space<vmem>>, %arg7: memref<1xf32, #tpu.memory_space<smem>>, %arg8: memref<16x1xf32, #tpu.memory_space<vmem>>) attributes {dimension_semantics = [#tpu.dimension_semantics<parallel>], iteration_bounds = array<i64: 1>, scalar_prefetch = 0 : i64, scratch_operands = 0 : i64, tpu.core_type = #tpu.core_type<tc>, window_params = [{transform_indices = @transform_0, window_bounds = array<i64: 16, 64>}, {transform_indices = @transform_1, window_bounds = array<i64: 16, 8>}, {pipeline_mode = #tpu.pipeline_mode<synchronous>, transform_indices = @transform_2, window_bounds = array<i64: 64, 128>}, {pipeline_mode = #tpu.pipeline_mode<synchronous>, transform_indices = @transform_3, window_bounds = array<i64: 8, 128>}, {pipeline_mode = #tpu.pipeline_mode<synchronous>, transform_indices = @transform_4, window_bounds = array<i64: 1, 128>}, {pipeline_mode = #tpu.pipeline_mode<synchronous>, transform_indices = @transform_5, window_bounds = array<i64: 1, 128>}, {transform_indices = @transform_6, window_bounds = array<i64: 1>}, {transform_indices = @transform_7, window_bounds = array<i64: 16, 1>}]} {
    %c0 = arith.constant 0 : index
    %c0_0 = arith.constant 0 : index
    %0 = vector.load %arg1[%c0, %c0_0] : memref<16x64xf32, #tpu.memory_space<vmem>>, vector<16x64xf32>
    %c0_1 = arith.constant 0 : index
    %c0_2 = arith.constant 0 : index
    %1 = vector.load %arg3[%c0_1, %c0_2] : memref<64x128xf32, #tpu.memory_space<vmem>>, vector<64x128xf32>
    %cst = arith.constant dense<0.000000e+00> : vector<16x128xf32>
    %2 = tpu.matmul %0, %1, %cst {dimension_numbers = #tpu.dot_dimension_numbers<[1], [0], [0], [1], [0, 0, 1, 1], [], []>} : vector<16x64xf32>, vector<64x128xf32>, vector<16x128xf32> -> vector<16x128xf32>
    %c0_3 = arith.constant 0 : index
    %c0_4 = arith.constant 0 : index
    %3 = vector.load %arg2[%c0_3, %c0_4] : memref<16x8xf32, #tpu.memory_space<vmem>>, vector<16x8xf32>
    %c0_5 = arith.constant 0 : index
    %c0_6 = arith.constant 0 : index
    %4 = vector.load %arg4[%c0_5, %c0_6] : memref<8x128xf32, #tpu.memory_space<vmem>>, vector<8x128xf32>
    %cst_7 = arith.constant dense<0.000000e+00> : vector<16x128xf32>
    %5 = tpu.matmul %3, %4, %cst_7 {dimension_numbers = #tpu.dot_dimension_numbers<[1], [0], [0], [1], [0, 0, 1, 1], [], []>} : vector<16x8xf32>, vector<8x128xf32>, vector<16x128xf32> -> vector<16x128xf32>
    %6 = arith.addf %2, %5 : vector<16x128xf32>
    %c0_8 = arith.constant 0 : index
    %c0_9 = arith.constant 0 : index
    %7 = vector.load %arg5[%c0_8, %c0_9] : memref<1x128xf32, #tpu.memory_space<vmem>>, vector<1x128xf32>
    %8 = vector.broadcast %7 : vector<1x128xf32> to vector<16x128xf32>
    %9 = arith.addf %6, %8 : vector<16x128xf32>
    %cst_10 = arith.constant 0.000000e+00 : f32
    %10 = vector.broadcast %cst_10 : f32 to vector<16x128xf32>
    %11 = arith.maximumf %9, %10 : vector<16x128xf32>
    %c0_11 = arith.constant 0 : index
    %c0_12 = arith.constant 0 : index
    %12 = vector.load %arg6[%c0_11, %c0_12] : memref<1x128xf32, #tpu.memory_space<vmem>>, vector<1x128xf32>
    %13 = vector.broadcast %12 : vector<1x128xf32> to vector<16x128xf32>
    %14 = arith.mulf %11, %13 : vector<16x128xf32>
    %cst_13 = arith.constant dense<0.000000e+00> : vector<16xf32>
    %15 = vector.multi_reduction <add>, %14, %cst_13 [1] : vector<16x128xf32> to vector<16xf32>
    %16 = vector.shape_cast %15 : vector<16xf32> to vector<16x1xf32>
    %c0_14 = arith.constant 0 : index
    %17 = memref.load %arg7[%c0_14] : memref<1xf32, #tpu.memory_space<smem>>
    %18 = vector.broadcast %17 : f32 to vector<16x1xf32>
    %19 = arith.addf %16, %18 : vector<16x1xf32>
    %c0_15 = arith.constant 0 : index
    %c0_16 = arith.constant 0 : index
    %20 = vector.load %arg8[%c0_15, %c0_16] : memref<16x1xf32, #tpu.memory_space<vmem>>, vector<16x1xf32>
    tpu.vector_store %arg8[%c0_15, %c0_16], %19 {strides = array<i32>} : memref<16x1xf32, #tpu.memory_space<vmem>>, vector<16x1xf32>,
    return
  }
  func.func @transform_0(%arg0: i32) -> (i32, i32) {
    %c0_i32 = arith.constant 0 : i32
    %c0_i32_0 = arith.constant 0 : i32
    return %arg0, %c0_i32 : i32, i32
  }
  func.func @transform_1(%arg0: i32) -> (i32, i32) {
    %c0_i32 = arith.constant 0 : i32
    %c0_i32_0 = arith.constant 0 : i32
    return %arg0, %c0_i32 : i32, i32
  }
  func.func @transform_2(%arg0: i32) -> (i32, i32) {
    %c0_i32 = arith.constant 0 : i32
    %c0_i32_0 = arith.constant 0 : i32
    %c0_i32_1 = arith.constant 0 : i32
    return %c0_i32, %c0_i32_0 : i32, i32
  }
  func.func @transform_3(%arg0: i32) -> (i32, i32) {
    %c0_i32 = arith.constant 0 : i32
    %c0_i32_0 = arith.constant 0 : i32
    %c0_i32_1 = arith.constant 0 : i32
    return %c0_i32, %c0_i32_0 : i32, i32
  }
  func.func @transform_4(%arg0: i32) -> (i32, i32) {
    %c0_i32 = arith.constant 0 : i32
    %c0_i32_0 = arith.constant 0 : i32
    %c0_i32_1 = arith.constant 0 : i32
    return %c0_i32, %c0_i32_0 : i32, i32
  }
  func.func @transform_5(%arg0: i32) -> (i32, i32) {
    %c0_i32 = arith.constant 0 : i32
    %c0_i32_0 = arith.constant 0 : i32
    %c0_i32_1 = arith.constant 0 : i32
    return %c0_i32, %c0_i32_0 : i32, i32
  }
  func.func @transform_6(%arg0: i32) -> i32 {
    %c0_i32 = arith.constant 0 : i32
    %c0_i32_0 = arith.constant 0 : i32
    return %c0_i32 : i32
  }
  func.func @transform_7(%arg0: i32) -> (i32, i32) {
    %c0_i32 = arith.constant 0 : i32
    %c0_i32_0 = arith.constant 0 : i32
    return %arg0, %c0_i32 : i32, i32
  }
}

</mosaic_0001>

<llo_original>
// kernel: tpu_custom_call.1
$region0: #{tpu_custom_call.1}
  #allocation0 [shape = 'u32[]', space=smem, size = 0x4, offset = 0x4, fixed_abs, tag = 'smem constant byte address 0x4 - core index']
  #allocation1 [shape = 'u32[144,128]{1,0:T(1,128)}', space=vmem, size = 0x12000, scoped, tag = 'internal scratch']
  #allocation2 [shape = 'f32[1]{0:T(128)S(6)}', space=smem, size = 0x200, scoped, tag = 'scoped memory for tpu_custom_call.1']
  %s0 = inlined_call_operand.vmem [shape: f32[16,64], index: 0, kind: input, shape index: {}]
  %s1 = inlined_call_operand.vmem [shape: f32[16,8], index: 1, kind: input, shape index: {}]
  %s2 = inlined_call_operand.hbm [shape: f32[64,128], index: 2, kind: input, shape index: {}]
  %s3 = inlined_call_operand.vmem [shape: f32[8,128], index: 3, kind: input, shape index: {}]
  %s4 = inlined_call_operand.vmem [shape: f32[1,128], index: 4, kind: input, shape index: {}]
  %s5 = inlined_call_operand.vmem [shape: f32[1,128], index: 5, kind: input, shape index: {}]
  %s6 = inlined_call_operand.<no memory space> [shape: f32[1], index: 6, kind: input, shape index: {}]
  %s7 = inlined_call_operand.vmem [shape: f32[16,1], index: 7, kind: output, shape index: {}]
  %s8 = sld [smem:[#allocation0]]
  $region42: #{tpu_custom_call.1} parent=0
    _
  %s10 = ssub.s32 1, %s8
  %s11 = scalar_select 0, %s10, %s8
  %12 = sst [smem:[#allocation2]] %s6
  $region1: #{tpu_custom_call.1} parent=0
    #allocation3 [shape = 'u8[32768]{0}', space=vmem, size = 0x8000, scoped, tag = 'input window, operand 2, single buffered']
    #allocation4 [shape = 's32[1]{0}', space=sflag, size = 0x4, scoped, tag = 'scoped memory for tpu_custom_call.1']
    %13 = vsyncpa [#allocation4], 0
    // Predicated region
    $region2: #{tpu_custom_call.1} parent=1 // pred_check
      _
    $region3: #{tpu_custom_call.1} parent=1 // pred_check_branch
      %15 = sbr.rel (0) target = $region5
    $region4: #{tpu_custom_call.1} parent=1 // pred_region
      _
    $region5: #{tpu_custom_call.1} parent=1 // pred_fallthru
      _
    // Predicated region
    $region6: #{tpu_custom_call.1} parent=1 // pred_check
      _
    $region7: #{tpu_custom_call.1} parent=1 // pred_check_branch
      %17 = sbr.rel (0) target = $region9
    $region8: #{tpu_custom_call.1} parent=1 // pred_region
      _
    $region9: #{tpu_custom_call.1} parent=1 // pred_fallthru
      _
    // Predicated region
    $region10: #{tpu_custom_call.1} parent=1 // pred_check
      _
    $region11: #{tpu_custom_call.1} parent=1 // pred_check_branch
      %19 = sbr.rel (0) target = $region13
    $region12: #{tpu_custom_call.1} parent=1 // pred_region
      %s21 = ssub.s32 1024, 1024
      %22 = vsyncadd [#allocation4], %s21
      %s23 = sshll.u32 [#allocation3], 4
      %s24 = int_to_ptr.vmem [resolvable:$true] %s23
      %29 = dma.hbm_to_vmem [thread:$0]  %s2, 1024, %s24, [#allocation4], 128, 128, 8
    $region13: #{tpu_custom_call.1} parent=1 // pred_fallthru
      _
    // Predicated region
    $region14: #{tpu_custom_call.1} parent=1 // pred_check
      _
    $region15: #{tpu_custom_call.1} parent=1 // pred_check_branch
      %31 = sbr.rel (0) target = $region17
    $region16: #{tpu_custom_call.1} parent=1 // pred_region
      _
    $region17: #{tpu_custom_call.1} parent=1 // pred_fallthru
      _
    // Predicated region
    $region18: #{tpu_custom_call.1} parent=1 // pred_check
      _
    $region19: #{tpu_custom_call.1} parent=1 // pred_check_branch
      %33 = sbr.rel (0) target = $region21
    $region20: #{tpu_custom_call.1} parent=1 // pred_region
      _
    $region21: #{tpu_custom_call.1} parent=1 // pred_fallthru
      _
    // Predicated region
    $region22: #{tpu_custom_call.1} parent=1 // pred_check
      _
    $region23: #{tpu_custom_call.1} parent=1 // pred_check_branch
      %35 = sbr.rel (0) target = $region25
    $region24: #{tpu_custom_call.1} parent=1 // pred_region
      _
    $region25: #{tpu_custom_call.1} parent=1 // pred_fallthru
      _
    // Predicated region
    $region26: #{tpu_custom_call.1} parent=1 // pred_check
      _
    $region27: #{tpu_custom_call.1} parent=1 // pred_check_branch
      %37 = sbr.rel (0) target = $region29
    $region28: #{tpu_custom_call.1} parent=1 // pred_region
      _
    $region29: #{tpu_custom_call.1} parent=1 // pred_fallthru
      _
    // Predicated region
    $region30: #{tpu_custom_call.1} parent=1 // pred_check
      _
    $region31: #{tpu_custom_call.1} parent=1 // pred_check_branch
      %39 = sbr.rel (0) target = $region33
    $region32: #{tpu_custom_call.1} parent=1 // pred_region
      %40 = dma.done [#allocation4], 1024
    $region33: #{tpu_custom_call.1} parent=1 // pred_fallthru
      _
    %v41 = vld [vmem:[%s0] sm:$0xff]
    %v42 = vld [vmem:[%s0 + $0x8] sm:$0xff]
    %v43 = vld [vmem:[#allocation3] sm:$0xff]
    %v44 = vld [vmem:[#allocation3 + $0x8] sm:$0xff]
    %v45 = vld [vmem:[#allocation3 + $0x10] sm:$0xff]
    %v46 = vld [vmem:[#allocation3 + $0x18] sm:$0xff]
    %v47 = vld [vmem:[#allocation3 + $0x20] sm:$0xff]
    %v48 = vld [vmem:[#allocation3 + $0x28] sm:$0xff]
    %v49 = vld [vmem:[#allocation3 + $0x30] sm:$0xff]
    %v50 = vld [vmem:[#allocation3 + $0x38] sm:$0xff]
    %v51 = vld [vmem:[%s1] sm:$0xff]
    %v52 = vld [vmem:[%s1 + $0x8] sm:$0xff]
    %v53 = vld [vmem:[%s3] sm:$0xff]
    %vm54 = vcmask 64512
    %v56 = vsel %vm54, %v51, 0
    %v59 = vsel %vm54, %v52, 0
    %61 = vmatprep.subr.mxu0 0.0
    %62 = vmatpush1.msra.mxu0 %v53
    %63 = vmatprep.subr.mxu0 0.0
    %64 = vmatpush1.msra.mxu0 0.0
    %65 = vmatprep.subr.mxu0 0.0
    %66 = vmatpush1.msra.mxu0 0.0
    %67 = vmatprep.subr.mxu0 0.0
    %68 = vmatpush1.msra.mxu0 0.0
    %69 = vmatprep.subr.mxu0 0.0
    %70 = vmatpush1.msra.mxu0 0.0
    %71 = vmatprep.subr.mxu0 0.0
    %72 = vmatpush1.msra.mxu0 0.0
    %73 = vmatprep.subr.mxu0 0.0
    %74 = vmatpush1.msra.mxu0 0.0
    %75 = vmatprep.subr.mxu0 0.0
    %76 = vmatpush1.msra.mxu0 0.0
    %77 = vmatprep.subr.mxu0 0.0
    %78 = vmatpush1.msra.mxu0 0.0
    %79 = vmatprep.subr.mxu0 0.0
    %80 = vmatpush1.msra.mxu0 0.0
    %81 = vmatprep.subr.mxu0 0.0
    %82 = vmatpush1.msra.mxu0 0.0
    %83 = vmatprep.subr.mxu0 0.0
    %84 = vmatpush1.msra.mxu0 0.0
    %85 = vmatprep.subr.mxu0 0.0
    %86 = vmatpush1.msra.mxu0 0.0
    %87 = vmatprep.subr.mxu0 0.0
    %88 = vmatpush1.msra.mxu0 0.0
    %89 = vmatprep.subr.mxu0 0.0
    %90 = vmatpush1.msra.mxu0 0.0
    %91 = vmatprep.subr.mxu0 0.0
    %92 = vmatpush1.msra.mxu0 0.0
    %93 = vmatprep.subr.mxu0 0.0
    %94 = vmatpush1.msra.mxu0 0.0
    %95 = vmatprep.subr.mxu0 0.0
    %96 = vmatpush1.msra.mxu0 0.0
    %97 = vmatprep.subr.mxu0 0.0
    %98 = vmatpush1.msra.mxu0 0.0
    %99 = vmatprep.subr.mxu0 0.0
    %100 = vmatpush1.msra.mxu0 0.0
    %101 = vmatprep.subr.mxu0 0.0
    %102 = vmatpush1.msra.mxu0 0.0
    %103 = vmatprep.subr.mxu0 0.0
    %104 = vmatpush1.msra.mxu0 0.0
    %105 = vmatprep.subr.mxu0 0.0
    %106 = vmatpush1.msra.mxu0 0.0
    %107 = vmatprep.subr.mxu0 0.0
    %108 = vmatpush1.msra.mxu0 0.0
    %109 = vmatprep.subr.mxu0 0.0
    %110 = vmatpush1.msra.mxu0 0.0
    %111 = vmatprep.subr.mxu0 0.0
    %112 = vmatpush1.msra.mxu0 0.0
    %113 = vmatprep.subr.mxu0 0.0
    %114 = vmatpush1.msra.mxu0 0.0
    %115 = vmatprep.subr.mxu0 0.0
    %116 = vmatpush1.msra.mxu0 0.0
    %117 = vmatprep.subr.mxu0 0.0
    %118 = vmatpush1.msra.mxu0 0.0
    %119 = vmatprep.subr.mxu0 0.0
    %120 = vmatpush1.msra.mxu0 0.0
    %121 = vmatprep.subr.mxu0 0.0
    %122 = vmatpush1.msra.mxu0 0.0
    %123 = vmatprep.subr.mxu0 0.0
    %124 = vmatpush1.msra.mxu0 0.0
    %125 = vmatprep.mubr.f32.mxu0 0.0
    %126 = vmatmul.mubr.f32.gmra.mrb[0].mxu0 %v56
    %v127 = vpop.f32.mrb[0].mxu0
    %v128 = vadd.f32 0.0, %v127
    %v129 = vpop.f32.mrb[0].mxu0
    %130 = vmatprep.mubr.f32.mxu0 0.0
    %131 = vmatmul.mubr.f32.gmra.mrb[0].mxu0 %v59
    %v132 = vpop.f32.mrb[0].mxu0
    %v133 = vadd.f32 0.0, %v132
    %v134 = vpop.f32.mrb[0].mxu0
    %135 = vdwg.mxu0
    %vm136 = vcmask 523264
    %v138 = vsel %vm136, %v41, 0
    %v141 = vsel %vm136, %v42, 0
    %143 = vmatprep.subr.mxu0 0.0
    %144 = vmatpush1.msra.mxu0 %v43
    %145 = vmatprep.subr.mxu0 0.0
    %146 = vmatpush1.msra.mxu0 %v44
    %147 = vmatprep.subr.mxu0 0.0
    %148 = vmatpush1.msra.mxu0 %v45
    %149 = vmatprep.subr.mxu0 0.0
    %150 = vmatpush1.msra.mxu0 %v46
    %151 = vmatprep.subr.mxu0 0.0
    %152 = vmatpush1.msra.mxu0 %v47
    %153 = vmatprep.subr.mxu0 0.0
    %154 = vmatpush1.msra.mxu0 %v48
    %155 = vmatprep.subr.mxu0 0.0
    %156 = vmatpush1.msra.mxu0 %v49
    %157 = vmatprep.subr.mxu0 0.0
    %158 = vmatpush1.msra.mxu0 %v50
    %159 = vmatprep.subr.mxu0 0.0
    %160 = vmatpush1.msra.mxu0 0.0
    %161 = vmatprep.subr.mxu0 0.0
    %162 = vmatpush1.msra.mxu0 0.0
    %163 = vmatprep.subr.mxu0 0.0
    %164 = vmatpush1.msra.mxu0 0.0
    %165 = vmatprep.subr.mxu0 0.0
    %166 = vmatpush1.msra.mxu0 0.0
    %167 = vmatprep.subr.mxu0 0.0
    %168 = vmatpush1.msra.mxu0 0.0
    %169 = vmatprep.subr.mxu0 0.0
    %170 = vmatpush1.msra.mxu0 0.0
    %171 = vmatprep.subr.mxu0 0.0
    %172 = vmatpush1.msra.mxu0 0.0
    %173 = vmatprep.subr.mxu0 0.0
    %174 = vmatpush1.msra.mxu0 0.0
    %175 = vmatprep.subr.mxu0 0.0
    %176 = vmatpush1.msra.mxu0 0.0
    %177 = vmatprep.subr.mxu0 0.0
    %178 = vmatpush1.msra.mxu0 0.0
    %179 = vmatprep.subr.mxu0 0.0
    %180 = vmatpush1.msra.mxu0 0.0
    %181 = vmatprep.subr.mxu0 0.0
    %182 = vmatpush1.msra.mxu0 0.0
    %183 = vmatprep.subr.mxu0 0.0
    %184 = vmatpush1.msra.mxu0 0.0
    %185 = vmatprep.subr.mxu0 0.0
    %186 = vmatpush1.msra.mxu0 0.0
    %187 = vmatprep.subr.mxu0 0.0
    %188 = vmatpush1.msra.mxu0 0.0
    %189 = vmatprep.subr.mxu0 0.0
    %190 = vmatpush1.msra.mxu0 0.0
    %191 = vmatprep.subr.mxu0 0.0
    %192 = vmatpush1.msra.mxu0 0.0
    %193 = vmatprep.subr.mxu0 0.0
    %194 = vmatpush1.msra.mxu0 0.0
    %195 = vmatprep.subr.mxu0 0.0
    %196 = vmatpush1.msra.mxu0 0.0
    %197 = vmatprep.subr.mxu0 0.0
    %198 = vmatpush1.msra.mxu0 0.0
    %199 = vmatprep.subr.mxu0 0.0
    %200 = vmatpush1.msra.mxu0 0.0
    %201 = vmatprep.subr.mxu0 0.0
    %202 = vmatpush1.msra.mxu0 0.0
    %203 = vmatprep.subr.mxu0 0.0
    %204 = vmatpush1.msra.mxu0 0.0
    %205 = vmatprep.subr.mxu0 0.0
    %206 = vmatpush1.msra.mxu0 0.0
    %207 = vmatprep.mubr.f32.mxu0 0.0
    %208 = vmatmul.mubr.f32.gmra.mrb[0].mxu0 %v138
    %v209 = vpop.f32.mrb[0].mxu0
    %v210 = vadd.f32 %v128, %v209
    %v211 = vpop.f32.mrb[0].mxu0
    %212 = vmatprep.mubr.f32.mxu0 0.0
    %213 = vmatmul.mubr.f32.gmra.mrb[0].mxu0 %v141
    %v214 = vpop.f32.mrb[0].mxu0
    %v215 = vadd.f32 %v133, %v214
    %v216 = vpop.f32.mrb[0].mxu0
    %217 = vdwg.mxu0
    %v218 = vld [vmem:[%s4] sm:$0x1]
    %v220 = vlaneseq
    %v221 = vshrl.u32 %v220, 7
    %v222 = vsub.s32 0, %v221
    %v223 = vrot.slane %v218, %v222
    %v225 = vadd.f32 %v210, %v223
    %v226 = vadd.f32 %v215, %v223
    %v227 = vmax.f32 %v225, 0.0
    %v228 = vmax.f32 %v226, 0.0
    %v229 = vld [vmem:[%s5] sm:$0x1]
    %v231 = vlaneseq
    %v232 = vshrl.u32 %v231, 7
    %v233 = vsub.s32 0, %v232
    %v234 = vrot.slane %v229, %v233
    %v236 = vmul.f32 %v227, %v234
    %v237 = vmul.f32 %v228, %v234
    %238 = vadd.xlane.f32.xlu0 %v236
    %v239 = vpop.xlane.xlu0 %238
    %240 = vadd.xlane.f32.xlu0 %v237
    %v241 = vpop.xlane.xlu0 %240
    %s242 = sld [smem:[#allocation2]]
    %v243 = vstv %s242
    %v244 = vadd.f32 %v239, %v243
    %v245 = vadd.f32 %v241, %v243
    %vm246 = vcmask 7168
    %247 = vst.msk [vmem:[%s7] sm:$0xff] %vm246, %v244
    %248 = vst.msk [vmem:[%s7 + $0x8] sm:$0xff] %vm246, %v245
    // Predicated region
    $region34: #{tpu_custom_call.1} parent=1 // pred_check
      _
    $region35: #{tpu_custom_call.1} parent=1 // pred_check_branch
      %250 = sbr.rel (0) target = $region37
    $region36: #{tpu_custom_call.1} parent=1 // pred_region
      _
    $region37: #{tpu_custom_call.1} parent=1 // pred_fallthru
      _
    // Predicated region
    $region38: #{tpu_custom_call.1} parent=1 // pred_check
      _
    $region39: #{tpu_custom_call.1} parent=1 // pred_check_branch
      %252 = sbr.rel (0) target = $region41
    $region40: #{tpu_custom_call.1} parent=1 // pred_region
      _
    $region41: #{tpu_custom_call.1} parent=1 // pred_fallthru
      _
    %253 = vsyncpa [#allocation4], 1

</llo_original>
